<compile_context>
chip_gen: v5e
topology: v5e:2x2
jax: 0.10.0
libtpu: 0.0.40
codegen_flags: <defaults>
</compile_context>

<pallas_src>
import functools

import jax
import jax.numpy as jnp
from jax import lax
from jax.experimental import pallas as pl
from jax.experimental.pallas import tpu as pltpu


def _round_up(a, b):
    return (a + b - 1) // b * b


def _mlp_kernel(x_ref, w1t_ref, b1t_ref, w2t_ref, b2t_ref, w3c_ref, b3_ref,
                o_ref):
    """Fused 3-layer MLP over one (tile_m, E) row block, feature-major."""
    cd = w1t_ref.dtype
    # Cast to the compute dtype on the VPU, under the DMA (no wrapper pass).
    x = x_ref[...].astype(cd)                                    # (tm, E)

    # Layer 1 (MXU, rhs-transposed "q @ k^T" form):
    #   h1t[h, m] = sum_e w1t[h, e] * x[m, e]   -> (h1p, tm), lane-dense.
    h1t = lax.dot_general(w1t_ref[...], x, (((1,), (1,)), ((), ())),
                          preferred_element_type=jnp.float32)
    h1t = jnp.maximum(h1t + b1t_ref[...], 0.0).astype(cd)        # bias+ReLU

    # Layer 2 (MXU, standard): (h2p, h1p) @ (h1p, tm) -> (h2p, tm).
    h2t = jnp.dot(w2t_ref[...], h1t, preferred_element_type=jnp.float32)
    h2t = jnp.maximum(h2t + b2t_ref[...], 0.0)                   # keep f32

    # Layer 3 (VPU): weighted sum over the feature rows -> lane-dense (1, tm).
    out = jnp.sum(h2t * w3c_ref[...], axis=0, keepdims=True) + b3_ref[...]
    o_ref[...] = out.astype(o_ref.dtype)


def _resident(shape):
    # Constant index map -> fetched once, stays resident in VMEM.
    return pl.BlockSpec(shape, lambda i: (0, 0))


def prepare_params(params, compute_dtype=jnp.float32):
    """One-time weight prep (hoisted out of the hot path).

    Transposes to feature-major, casts matmul weights to the compute dtype and
    zero-pads the tiny hidden dims up to multiples of 8 so every in-kernel
    shape is MXU/sublane friendly (padded rows/cols contribute exactly 0).
    """
    cd = jnp.dtype(compute_dtype)
    w1, b1 = params["w1"], params["b1"]        # (E, h1), (1, h1)
    w2, b2 = params["w2"], params["b2"]        # (h1, h2), (1, h2)
    w3, b3 = params["w3"], params["b3"]        # (h2, 1), (1, 1)
    E, h1 = w1.shape
    h2 = w2.shape[1]
    h1p, h2p = _round_up(h1, 8), _round_up(h2, 8)

    def pad2(a, rows, cols):
        return jnp.pad(a, ((0, rows - a.shape[0]), (0, cols - a.shape[1])))

    return dict(
        w1t=pad2(jnp.asarray(w1, cd).T, h1p, E),                    # (h1p, E)
        b1t=pad2(jnp.asarray(b1, jnp.float32).T, h1p, 1),           # (h1p, 1)
        w2t=pad2(jnp.asarray(w2, cd).T, h2p, h1p),                  # (h2p, h1p)
        b2t=pad2(jnp.asarray(b2, jnp.float32).T, h2p, 1),           # (h2p, 1)
        w3c=pad2(jnp.asarray(w3, jnp.float32), h2p, 1),             # (h2p, 1)
        b3=jnp.asarray(b3, jnp.float32).reshape(1, 1),              # (1, 1)
    )


@functools.partial(jax.jit, static_argnames=("embedding_dim", "tile_m"))
def dense_network_forward(x, prepared, *, embedding_dim, tile_m=16384):
    """Forward pass of DenseNetwork.

    x: any shape that reshapes to (-1, embedding_dim); streamed in its native
       dtype (no wrapper-side cast).
    prepared: output of prepare_params().
    Returns (N, 1) float32.
    """
    E = embedding_dim
    assert E % 16 == 0 and E >= 16, "embedding_dim must be a multiple of 16"
    assert tile_m % 256 == 0 and tile_m >= 256, "tile_m must be a 256-multiple"

    h1p, E_chk = prepared["w1t"].shape
    h2p = prepared["w2t"].shape[0]
    assert E_chk == E and prepared["w2t"].shape == (h2p, h1p)

    x2d = x.reshape((-1, E))               # native dtype, cast happens in-kernel
    n = x2d.shape[0]

    # VMEM rows are lane-padded to 128 lanes.
    bytes_per_row = max(128, E) * x2d.dtype.itemsize
    if n <= 256:
        # Tiny inputs: single block, pad at most 7 rows.
        tm = max(8, _round_up(n, 8))
        if tm != n:
            x2d = jnp.pad(x2d, ((0, tm - n), (0, 0)))
    else:
        # Cap so the double-buffered x tile stays <= ~16 MiB, and keep
        # grid_m >= 2 so both v7x TensorCores get work.
        tm_vmem_cap = max(256, ((16 << 20) // (2 * bytes_per_row)) // 256 * 256)
        tm = min(tile_m, tm_vmem_cap, max(256, _round_up(pl.cdiv(n, 2), 256)))
    grid_m = pl.cdiv(x2d.shape[0], tm)

    # Scoped-VMEM budget: double-buffered x + double-buffered (1, tm) out +
    # feature-major intermediates + resident weights.  Floor 32 MiB (raises
    # v5e's 16 MiB default), cap at v7x's 64 MiB physical VMEM.
    need = (2 * tm * bytes_per_row + 2 * tm * 4
            + tm * (h1p + 2 * h2p) * 4 + (4 << 20))
    vmem_limit = int(min(max(32 << 20, need), 64 << 20))

    out = pl.pallas_call(
        _mlp_kernel,
        out_shape=jax.ShapeDtypeStruct((grid_m, tm), jnp.float32),
        grid_spec=pltpu.PrefetchScalarGridSpec(
            num_scalar_prefetch=0,
            grid=(grid_m,),
            in_specs=[
                # x row tile streams; everything else stays resident in VMEM.
                pl.BlockSpec((tm, E), lambda i: (i, 0)),
                _resident((h1p, E)),      # w1^T
                _resident((h1p, 1)),      # b1 (column)
                _resident((h2p, h1p)),    # w2^T
                _resident((h2p, 1)),      # b2 (column)
                _resident((h2p, 1)),      # w3 (column)
                _resident((1, 1)),        # b3
            ],
            # Lane-dense output: one (1, tile_m) row per grid step.
            out_specs=pl.BlockSpec((1, tm), lambda i: (i, 0)),
        ),
        compiler_params=pltpu.CompilerParams(
            dimension_semantics=("parallel",),
            vmem_limit_bytes=vmem_limit),
    )(x2d, prepared["w1t"], prepared["b1t"], prepared["w2t"],
      prepared["b2t"], prepared["w3c"], prepared["b3"])

    # Row-major (grid_m, tile_m) matches the original row order; garbage from
    # any partial boundary block lands only in slots >= n and is sliced off.
    return out.reshape((-1, 1))[:n]


def init_params(key, embedding_dim):
    """Deterministic synthetic init matching the nn.Linear shapes (f32)."""
    E = embedding_dim
    h1, h2 = E // 4, E // 16
    ks = jax.random.split(key, 6)

    def linear(kw, kb, fan_in, fan_out):
        bound = 1.0 / jnp.sqrt(fan_in)
        w = jax.random.uniform(kw, (fan_in, fan_out), jnp.float32, -bound, bound)
        b = jax.random.uniform(kb, (1, fan_out), jnp.float32, -bound, bound)
        return w, b

    w1, b1 = linear(ks[0], ks[1], E, h1)
    w2, b2 = linear(ks[2], ks[3], h1, h2)
    w3, b3 = linear(ks[4], ks[5], h2, 1)
    return dict(w1=w1, b1=b1, w2=w2, b2=b2, w3=w3, b3=b3)


def _reference(x, params, embedding_dim, compute_dtype=jnp.float32):
    """Pure-JAX reference mirroring the kernel's precision recipe."""
    cd = jnp.dtype(compute_dtype)
    hp = lax.Precision.HIGHEST
    x2d = x.reshape((-1, embedding_dim)).astype(cd)
    h = jnp.dot(x2d, params["w1"].astype(cd), precision=hp,
                preferred_element_type=jnp.float32) + params["b1"]
    h = jnp.maximum(h, 0.0).astype(cd)
    h = jnp.dot(h, params["w2"].astype(cd), precision=hp,
                preferred_element_type=jnp.float32) + params["b2"]
    h = jnp.maximum(h, 0.0)                                   # f32, like the kernel
    return jnp.dot(h, params["w3"].astype(jnp.float32), precision=hp,
                   preferred_element_type=jnp.float32) + params["b3"]


if __name__ == "__main__":
    embedding_dim = 64          # E=64 -> hidden dims 16 and 4
    batch, seq = 2, 8           # x reshapes to (16, 64)

    key = jax.random.PRNGKey(0)
    kx, kp, kx2 = jax.random.split(key, 3)
    x = jax.random.normal(kx, (batch, seq, embedding_dim), jnp.float32)
    params = init_params(kp, embedding_dim)

    # 1) float32 compute path: parity with the f32 PyTorch module.
    prep_f32 = prepare_params(params, jnp.float32)
    out = jax.block_until_ready(
        dense_network_forward(x, prep_f32, embedding_dim=embedding_dim))
    ref = _reference(x, params, embedding_dim, jnp.float32)
    assert out.shape == (batch * seq, 1), out.shape
    assert jnp.allclose(out, ref, atol=5e-3, rtol=5e-3), (
        f"f32 mismatch, max abs err = {float(jnp.max(jnp.abs(out - ref)))}")

    # 2) bfloat16 compute path vs a recipe-matched reference.
    prep_bf16 = prepare_params(params, jnp.bfloat16)
    out_bf = jax.block_until_ready(
        dense_network_forward(x, prep_bf16, embedding_dim=embedding_dim))
    ref_bf = _reference(x, params, embedding_dim, jnp.bfloat16)
    assert jnp.allclose(out_bf, ref_bf, atol=5e-3, rtol=5e-3), (
        f"bf16 mismatch, max abs err = {float(jnp.max(jnp.abs(out_bf - ref_bf)))}")

    # 3) Multi-block grid with a partial last block (exercises grid_m >= 2).
    x_big = jax.random.normal(kx2, (600, embedding_dim), jnp.float32)
    out_big = jax.block_until_ready(
        dense_network_forward(x_big, prep_f32, embedding_dim=embedding_dim,
                              tile_m=512))
    ref_big = _reference(x_big, params, embedding_dim, jnp.float32)
    assert out_big.shape == (600, 1), out_big.shape
    assert jnp.allclose(out_big, ref_big, atol=5e-3, rtol=5e-3), (
        f"multiblock mismatch, max abs err = "
        f"{float(jnp.max(jnp.abs(out_big - ref_big)))}")

    print("KERNEL_OK")
</pallas_src>

<mosaic_0001>
module attributes {stable_mosaic.version = 11 : i64} {
  func.func @_mlp_kernel(%arg0: i32, %arg1: memref<16x64xf32, #tpu.memory_space<vmem>>, %arg2: memref<16x64xf32, #tpu.memory_space<vmem>>, %arg3: memref<16x1xf32, #tpu.memory_space<vmem>>, %arg4: memref<8x16xf32, #tpu.memory_space<vmem>>, %arg5: memref<8x1xf32, #tpu.memory_space<vmem>>, %arg6: memref<8x1xf32, #tpu.memory_space<vmem>>, %arg7: memref<1x1xf32, #tpu.memory_space<vmem>>, %arg8: memref<1x16xf32, #tpu.memory_space<vmem>>) attributes {dimension_semantics = [#tpu.dimension_semantics<parallel>], iteration_bounds = array<i64: 1>, scalar_prefetch = 0 : i64, scratch_operands = 0 : i64, tpu.core_type = #tpu.core_type<tc>, window_params = [{transform_indices = @transform_0, window_bounds = array<i64: 16, 64>}, {pipeline_mode = #tpu.pipeline_mode<synchronous>, transform_indices = @transform_1, window_bounds = array<i64: 16, 64>}, {pipeline_mode = #tpu.pipeline_mode<synchronous>, transform_indices = @transform_2, window_bounds = array<i64: 16, 1>}, {pipeline_mode = #tpu.pipeline_mode<synchronous>, transform_indices = @transform_3, window_bounds = array<i64: 8, 16>}, {pipeline_mode = #tpu.pipeline_mode<synchronous>, transform_indices = @transform_4, window_bounds = array<i64: 8, 1>}, {pipeline_mode = #tpu.pipeline_mode<synchronous>, transform_indices = @transform_5, window_bounds = array<i64: 8, 1>}, {pipeline_mode = #tpu.pipeline_mode<synchronous>, transform_indices = @transform_6, window_bounds = array<i64: 1, 1>}, {transform_indices = @transform_7, window_bounds = array<i64: 1, 16>}]} {
    %c0 = arith.constant 0 : index
    %c0_0 = arith.constant 0 : index
    %0 = vector.load %arg1[%c0, %c0_0] : memref<16x64xf32, #tpu.memory_space<vmem>>, vector<16x64xf32>
    %c0_1 = arith.constant 0 : index
    %c0_2 = arith.constant 0 : index
    %1 = vector.load %arg2[%c0_1, %c0_2] : memref<16x64xf32, #tpu.memory_space<vmem>>, vector<16x64xf32>
    %cst = arith.constant dense<0.000000e+00> : vector<16x16xf32>
    %2 = tpu.matmul %1, %0, %cst {dimension_numbers = #tpu.dot_dimension_numbers<[1], [1], [0], [0], [0, 0, 1, 0], [], []>} : vector<16x64xf32>, vector<16x64xf32>, vector<16x16xf32> -> vector<16x16xf32>
    %c0_3 = arith.constant 0 : index
    %c0_4 = arith.constant 0 : index
    %3 = vector.load %arg3[%c0_3, %c0_4] : memref<16x1xf32, #tpu.memory_space<vmem>>, vector<16x1xf32>
    %4 = vector.broadcast %3 : vector<16x1xf32> to vector<16x16xf32>
    %5 = arith.addf %2, %4 : vector<16x16xf32>
    %cst_5 = arith.constant 0.000000e+00 : f32
    %6 = vector.broadcast %cst_5 : f32 to vector<16x16xf32>
    %7 = arith.maximumf %5, %6 : vector<16x16xf32>
    %c0_6 = arith.constant 0 : index
    %c0_7 = arith.constant 0 : index
    %8 = vector.load %arg4[%c0_6, %c0_7] : memref<8x16xf32, #tpu.memory_space<vmem>>, vector<8x16xf32>
    %cst_8 = arith.constant dense<0.000000e+00> : vector<8x16xf32>
    %9 = tpu.matmul %8, %7, %cst_8 {dimension_numbers = #tpu.dot_dimension_numbers<[1], [0], [0], [1], [0, 0, 1, 1], [], []>} : vector<8x16xf32>, vector<16x16xf32>, vector<8x16xf32> -> vector<8x16xf32>
    %c0_9 = arith.constant 0 : index
    %c0_10 = arith.constant 0 : index
    %10 = vector.load %arg5[%c0_9, %c0_10] : memref<8x1xf32, #tpu.memory_space<vmem>>, vector<8x1xf32>
    %11 = vector.broadcast %10 : vector<8x1xf32> to vector<8x16xf32>
    %12 = arith.addf %9, %11 : vector<8x16xf32>
    %cst_11 = arith.constant 0.000000e+00 : f32
    %13 = vector.broadcast %cst_11 : f32 to vector<8x16xf32>
    %14 = arith.maximumf %12, %13 : vector<8x16xf32>
    %c0_12 = arith.constant 0 : index
    %c0_13 = arith.constant 0 : index
    %15 = vector.load %arg6[%c0_12, %c0_13] : memref<8x1xf32, #tpu.memory_space<vmem>>, vector<8x1xf32>
    %16 = vector.broadcast %15 : vector<8x1xf32> to vector<8x16xf32>
    %17 = arith.mulf %14, %16 : vector<8x16xf32>
    %cst_14 = arith.constant dense<0.000000e+00> : vector<16xf32>
    %18 = vector.multi_reduction <add>, %17, %cst_14 [0] : vector<8x16xf32> to vector<16xf32>
    %19 = vector.shape_cast %18 : vector<16xf32> to vector<1x16xf32>
    %c0_15 = arith.constant 0 : index
    %c0_16 = arith.constant 0 : index
    %20 = vector.load %arg7[%c0_15, %c0_16] : memref<1x1xf32, #tpu.memory_space<vmem>>, vector<1x1xf32>
    %21 = vector.broadcast %20 : vector<1x1xf32> to vector<1x16xf32>
    %22 = arith.addf %19, %21 : vector<1x16xf32>
    %c0_17 = arith.constant 0 : index
    %c0_18 = arith.constant 0 : index
    %23 = vector.load %arg8[%c0_17, %c0_18] : memref<1x16xf32, #tpu.memory_space<vmem>>, vector<1x16xf32>
    tpu.vector_store %arg8[%c0_17, %c0_18], %22 {strides = array<i32>} : memref<1x16xf32, #tpu.memory_space<vmem>>, vector<1x16xf32>,
    return
  }
  func.func @transform_0(%arg0: i32) -> (i32, i32) {
    %c0_i32 = arith.constant 0 : i32
    %c0_i32_0 = arith.constant 0 : i32
    return %arg0, %c0_i32 : i32, i32
  }
  func.func @transform_1(%arg0: i32) -> (i32, i32) {
    %c0_i32 = arith.constant 0 : i32
    %c0_i32_0 = arith.constant 0 : i32
    %c0_i32_1 = arith.constant 0 : i32
    return %c0_i32, %c0_i32_0 : i32, i32
  }
  func.func @transform_2(%arg0: i32) -> (i32, i32) {
    %c0_i32 = arith.constant 0 : i32
    %c0_i32_0 = arith.constant 0 : i32
    %c0_i32_1 = arith.constant 0 : i32
    return %c0_i32, %c0_i32_0 : i32, i32
  }
  func.func @transform_3(%arg0: i32) -> (i32, i32) {
    %c0_i32 = arith.constant 0 : i32
    %c0_i32_0 = arith.constant 0 : i32
    %c0_i32_1 = arith.constant 0 : i32
    return %c0_i32, %c0_i32_0 : i32, i32
  }
  func.func @transform_4(%arg0: i32) -> (i32, i32) {
    %c0_i32 = arith.constant 0 : i32
    %c0_i32_0 = arith.constant 0 : i32
    %c0_i32_1 = arith.constant 0 : i32
    return %c0_i32, %c0_i32_0 : i32, i32
  }
  func.func @transform_5(%arg0: i32) -> (i32, i32) {
    %c0_i32 = arith.constant 0 : i32
    %c0_i32_0 = arith.constant 0 : i32
    %c0_i32_1 = arith.constant 0 : i32
    return %c0_i32, %c0_i32_0 : i32, i32
  }
  func.func @transform_6(%arg0: i32) -> (i32, i32) {
    %c0_i32 = arith.constant 0 : i32
    %c0_i32_0 = arith.constant 0 : i32
    %c0_i32_1 = arith.constant 0 : i32
    return %c0_i32, %c0_i32_0 : i32, i32
  }
  func.func @transform_7(%arg0: i32) -> (i32, i32) {
    %c0_i32 = arith.constant 0 : i32
    %c0_i32_0 = arith.constant 0 : i32
    return %arg0, %c0_i32 : i32, i32
  }
}

</mosaic_0001>

<llo_original>
// kernel: dense_network_forward.1
$region0: #{dense_network_forward.1}
  #allocation0 [shape = 'u32[]', space=smem, size = 0x4, offset = 0x4, fixed_abs, tag = 'smem constant byte address 0x4 - core index']
  #allocation1 [shape = 'u32[72,128]{1,0:T(1,128)}', space=vmem, size = 0x9000, scoped, tag = 'internal scratch']
  #allocation2 [shape = 'f32[1,1]{1,0:T(1,128)S(1)}', space=vmem, size = 0x200, scoped, tag = 'scoped memory for dense_network_forward.1']
  %s0 = inlined_call_operand.vmem [shape: f32[16,64], index: 0, kind: input, shape index: {}]
  %s1 = inlined_call_operand.vmem [shape: f32[16,64], index: 1, kind: input, shape index: {}]
  %s2 = inlined_call_operand.vmem [shape: f32[16,1], index: 2, kind: input, shape index: {}]
  %s3 = inlined_call_operand.hbm [shape: f32[8,16], index: 3, kind: input, shape index: {}]
  %s4 = inlined_call_operand.vmem [shape: f32[8,1], index: 4, kind: input, shape index: {}]
  %s5 = inlined_call_operand.vmem [shape: f32[8,1], index: 5, kind: input, shape index: {}]
  %s6 = inlined_call_operand.<no memory space> [shape: f32[1,1], index: 6, kind: input, shape index: {}]
  %s7 = inlined_call_operand.hbm [shape: f32[1,16], index: 7, kind: output, shape index: {}]
  %s8 = sld [smem:[#allocation0]]
  $region42: #{dense_network_forward.1} parent=0
    _
  %s10 = ssub.s32 1, %s8
  %s11 = scalar_select 0, %s10, %s8
  %v12 = vstv %s6
  %13 = vst [vmem:[#allocation2] sm:$0x1] %v12
  $region1: #{dense_network_forward.1} parent=0
    #allocation3 [shape = 'u8[4096]{0}', space=vmem, size = 0x1000, scoped, tag = 'input window, operand 3, single buffered']
    #allocation4 [shape = 's32[1]{0}', space=sflag, size = 0x4, scoped, tag = 'scoped memory for dense_network_forward.1']
    #allocation5 [shape = 's32[1]{0}', space=sflag, size = 0x4, scoped, tag = 'scoped memory for dense_network_forward.1']
    #allocation6 [shape = 'u8[512]{0}', space=vmem, size = 0x400, scoped, tag = 'output window, operand 0, single buffered']
    %14 = vsyncpa [#allocation4], 0
    %15 = vsyncpa [#allocation5], 0
    // Predicated region
    $region2: #{dense_network_forward.1} parent=1 // pred_check
      _
    $region3: #{dense_network_forward.1} parent=1 // pred_check_branch
      %17 = sbr.rel (0) target = $region5
    $region4: #{dense_network_forward.1} parent=1 // pred_region
      _
    $region5: #{dense_network_forward.1} parent=1 // pred_fallthru
      _
    // Predicated region
    $region6: #{dense_network_forward.1} parent=1 // pred_check
      _
    $region7: #{dense_network_forward.1} parent=1 // pred_check_branch
      %19 = sbr.rel (0) target = $region9
    $region8: #{dense_network_forward.1} parent=1 // pred_region
      _
    $region9: #{dense_network_forward.1} parent=1 // pred_fallthru
      _
    // Predicated region
    $region10: #{dense_network_forward.1} parent=1 // pred_check
      _
    $region11: #{dense_network_forward.1} parent=1 // pred_check_branch
      %21 = sbr.rel (0) target = $region13
    $region12: #{dense_network_forward.1} parent=1 // pred_region
      _
    $region13: #{dense_network_forward.1} parent=1 // pred_fallthru
      _
    // Predicated region
    $region14: #{dense_network_forward.1} parent=1 // pred_check
      _
    $region15: #{dense_network_forward.1} parent=1 // pred_check_branch
      %23 = sbr.rel (0) target = $region17
    $region16: #{dense_network_forward.1} parent=1 // pred_region
      %25 = vsyncadd [#allocation4], 0
      %s27 = sshll.u32 %s3, 4
      %s28 = int_to_ptr.hbm [resolvable:$true] %s27
      %s29 = sshll.u32 [#allocation3], 4
      %s30 = int_to_ptr.vmem [resolvable:$true] %s29
      %32 = dma.hbm_to_vmem [thread:$0]  %s28, 128, %s30, [#allocation4]
    $region17: #{dense_network_forward.1} parent=1 // pred_fallthru
      _
    // Predicated region
    $region18: #{dense_network_forward.1} parent=1 // pred_check
      _
    $region19: #{dense_network_forward.1} parent=1 // pred_check_branch
      %34 = sbr.rel (0) target = $region21
    $region20: #{dense_network_forward.1} parent=1 // pred_region
      _
    $region21: #{dense_network_forward.1} parent=1 // pred_fallthru
      _
    // Predicated region
    $region22: #{dense_network_forward.1} parent=1 // pred_check
      _
    $region23: #{dense_network_forward.1} parent=1 // pred_check_branch
      %36 = sbr.rel (0) target = $region25
    $region24: #{dense_network_forward.1} parent=1 // pred_region
      _
    $region25: #{dense_network_forward.1} parent=1 // pred_fallthru
      _
    // Predicated region
    $region26: #{dense_network_forward.1} parent=1 // pred_check
      _
    $region27: #{dense_network_forward.1} parent=1 // pred_check_branch
      %38 = sbr.rel (0) target = $region29
    $region28: #{dense_network_forward.1} parent=1 // pred_region
      _
    $region29: #{dense_network_forward.1} parent=1 // pred_fallthru
      _
    // Predicated region
    $region30: #{dense_network_forward.1} parent=1 // pred_check
      _
    $region31: #{dense_network_forward.1} parent=1 // pred_check_branch
      %40 = sbr.rel (0) target = $region33
    $region32: #{dense_network_forward.1} parent=1 // pred_region
      %42 = dma.done [#allocation4], 128
    $region33: #{dense_network_forward.1} parent=1 // pred_fallthru
      _
    %v43 = vld [vmem:[%s0] sm:$0xff]
    %v44 = vld [vmem:[%s0 + $0x8] sm:$0xff]
    %v45 = vld [vmem:[%s1] sm:$0xff]
    %v46 = vld [vmem:[%s1 + $0x8] sm:$0xff]
    %v47 = vld [vmem:[%s2] sm:$0xff]
    %v48 = vld [vmem:[%s2 + $0x8] sm:$0xff]
    %50 = vset.pattern.permute.xlu0 0
    %51 = vperm.xlu0 %50, %v47
    %v52 = vpop.permute.xlu0 %51
    %55 = vset.pattern.permute.xlu0 0
    %56 = vperm.xlu0 %55, %v48
    %v57 = vpop.permute.xlu0 %56
    %vm59 = vcmask 523264
    %v61 = vsel %vm59, %v45, 0
    %v64 = vsel %vm59, %v46, 0
    %v67 = vsel %vm59, %v43, 0
    %v70 = vsel %vm59, %v44, 0
    %72 = vmatpush.xpose.msra.mxu0 0.0
    %73 = vmatpush.xpose.msra.mxu0 0.0
    %74 = vmatpush.xpose.msra.mxu0 0.0
    %75 = vmatpush.xpose.msra.mxu0 0.0
    %76 = vmatpush.xpose.msra.mxu0 0.0
    %77 = vmatpush.xpose.msra.mxu0 0.0
    %78 = vmatpush.xpose.msra.mxu0 0.0
    %79 = vmatpush.xpose.msra.mxu0 0.0
    %80 = vmatpush.xpose.msra.mxu0 0.0
    %81 = vmatpush.xpose.msra.mxu0 0.0
    %82 = vmatpush.xpose.msra.mxu0 0.0
    %83 = vmatpush.xpose.msra.mxu0 0.0
    %84 = vmatpush.xpose.msra.mxu0 0.0
    %85 = vmatpush.xpose.msra.mxu0 0.0
    %86 = vmatpush.xpose.msra.mxu0 %v70
    %87 = vmatpush.xpose.msra.mxu0 %v67
    %88 = vmatmul.f32.gmra.mxu0 %v61
    %v89 = vpop.f32.mrf.mxu0
    %v90 = vadd.f32 %v52, %v89
    %91 = vmatmul.f32.gmra.mxu0 %v64
    %v92 = vpop.f32.mrf.mxu0
    %v93 = vadd.f32 %v57, %v92
    %94 = vdwg.mxu0
    %v95 = vmax.f32 %v90, 0.0
    %v96 = vmax.f32 %v93, 0.0
    %v97 = vld [vmem:[#allocation3] sm:$0xff]
    %v98 = vld [vmem:[%s4] sm:$0xff]
    %100 = vset.pattern.permute.xlu0 0
    %101 = vperm.xlu0 %100, %v98
    %v102 = vpop.permute.xlu0 %101
    %vm104 = vcmask 130048
    %v106 = vsel %vm104, %v97, 0
    %108 = vmatpush.msra.mxu0 0.0
    %109 = vmatpush.msra.mxu0 0.0
    %110 = vmatpush.msra.mxu0 0.0
    %111 = vmatpush.msra.mxu0 0.0
    %112 = vmatpush.msra.mxu0 0.0
    %113 = vmatpush.msra.mxu0 0.0
    %114 = vmatpush.msra.mxu0 0.0
    %115 = vmatpush.msra.mxu0 0.0
    %116 = vmatpush.msra.mxu0 0.0
    %117 = vmatpush.msra.mxu0 0.0
    %118 = vmatpush.msra.mxu0 0.0
    %119 = vmatpush.msra.mxu0 0.0
    %120 = vmatpush.msra.mxu0 0.0
    %121 = vmatpush.msra.mxu0 0.0
    %122 = vmatpush.msra.mxu0 %v96
    %123 = vmatpush.msra.mxu0 %v95
    %124 = vmatmul.f32.gmra.mxu0 %v106
    %v125 = vpop.f32.mrf.mxu0
    %v126 = vadd.f32 %v102, %v125
    %127 = vdwg.mxu0
    %v128 = vmax.f32 %v126, 0.0
    %v129 = vld [vmem:[%s5] sm:$0xff]
    %131 = vset.pattern.permute.xlu0 0
    %132 = vperm.xlu0 %131, %v129
    %v133 = vpop.permute.xlu0 %132
    %v135 = vmul.f32 %v128, %v133
    %v136 = vsel %vm104, %v135, 0.0
    %v137 = vrot.slane %v136, 4
    %v138 = vadd.f32 %v136, %v137
    %v139 = vrot.slane %v138, 2
    %v140 = vadd.f32 %v138, %v139
    %v141 = vrot.slane %v140, 1
    %v142 = vadd.f32 %v140, %v141
    %v143 = vld [vmem:[#allocation2] sm:$0x1]
    %145 = vset.pattern.permute.xlu0 0
    %146 = vperm.xlu0 %145, %v143
    %v147 = vpop.permute.xlu0 %146
    %v149 = vperm.slane %v147, 0
    %v150 = vadd.f32 %v142, %v149
    %vm151 = vcmask 122880
    %152 = vst.msk [vmem:[#allocation6] sm:$0x1] %vm151, %v150
    // Predicated region
    $region34: #{dense_network_forward.1} parent=1 // pred_check
      _
    $region35: #{dense_network_forward.1} parent=1 // pred_check_branch
      %154 = sbr.rel (0) target = $region37
    $region36: #{dense_network_forward.1} parent=1 // pred_region
      %156 = vsyncadd [#allocation5], 0
      %s158 = sshll.u32 [#allocation6], 4
      %s159 = int_to_ptr.vmem [resolvable:$true] %s158
      %s160 = sshll.u32 %s7, 4
      %s161 = int_to_ptr.hbm [resolvable:$true] %s160
      %163 = dma.vmem_to_hbm [thread:$0]  %s159, 16, %s161, [#allocation5]
    $region37: #{dense_network_forward.1} parent=1 // pred_fallthru
      _
    // Predicated region
    $region38: #{dense_network_forward.1} parent=1 // pred_check
      _
    $region39: #{dense_network_forward.1} parent=1 // pred_check_branch
      %165 = sbr.rel (0) target = $region41
    $region40: #{dense_network_forward.1} parent=1 // pred_region
      %167 = dma.done [#allocation5], 16
    $region41: #{dense_network_forward.1} parent=1 // pred_fallthru
      _
    %168 = vsyncpa [#allocation4], 1
    %169 = vsyncpa [#allocation5], 1

</llo_original>
